<compile_context>
chip_gen: v7x
topology: tpu7x:2x2x1
jax: 0.10.0
libtpu: 0.0.40
codegen_flags: <defaults>
</compile_context>

<pallas_src>
import functools

import jax
import jax.numpy as jnp
from jax.experimental import pallas as pl
from jax.experimental.pallas import tpu as pltpu

IN_DIM = 19
HID_DIM = 270
OUT_DIM = 2
OUT_PAD = 128  # lane-dense padded output width


def _net_kernel(x_ref, bits_ref, w1_ref, b1_ref, w2_ref, b2_ref, o_ref, *,
                threshold, apply_dropout):
    # ---- fc1: (TB, 19) @ (19, 270) + (1, 270) ; bf16 MXU operands, f32 accumulate ----
    h = jnp.dot(x_ref[...], w1_ref[...], preferred_element_type=jnp.float32)
    h = h + b1_ref[...]

    # ---- dropout(p): integer-threshold compare on host-supplied random bits ----
    # (1/(1-p) scale is folded into w2 in the wrapper, so this is a pure zero/keep select)
    if apply_dropout:
        keep = bits_ref[...] >= jnp.uint32(threshold)
        h = jnp.where(keep, h, 0.0)

    # ---- relu ----
    h = jnp.maximum(h, 0.0)

    # ---- fc2: (TB, 270) @ (270, 128) + (1, 128)  (columns >= OUT_DIM are zero pad) ----
    y = jnp.dot(h, w2_ref[...], preferred_element_type=jnp.float32)
    y = y + b2_ref[...]

    # ---- sigmoid (lane-dense store: full 128-wide tile, sliced outside) ----
    o_ref[...] = 1.0 / (1.0 + jnp.exp(-y))


def net_forward(x, w1, b1, w2, b2, *, p, key, block_b=512):
    """Forward pass of Net. x: (B, 19) f32. Returns (B, 2) f32.

    Dropout is applied in training mode (like F.dropout's default).
    """
    assert 0.0 <= p < 1.0, "p must be in [0, 1)"
    B = x.shape[0]

    # ---- batch tiling / padding ----
    if B <= block_b:
        TB = B                      # single tile == full batch (always a legal block)
        Bp = B
    else:
        TB = block_b                # multiple of 8 by construction
        Bp = pl.cdiv(B, TB) * TB
    if Bp != B:
        x = jnp.pad(x, ((0, Bp - B), (0, 0)))

    # ---- dropout randomness (host-side uint32 bits; one row per padded batch row) ----
    apply_dropout = p > 0.0
    if apply_dropout:
        bits = jax.random.bits(key, (Bp, HID_DIM), dtype=jnp.uint32)
        threshold = min(int(round(p * (2 ** 32))), 2 ** 32 - 1)
        keep_scale = 1.0 / (1.0 - p)
    else:
        bits = jnp.zeros((Bp, HID_DIM), dtype=jnp.uint32)
        threshold = 0
        keep_scale = 1.0

    # ---- operand prep ----
    x_bf = x.astype(jnp.bfloat16)
    w1_bf = w1.astype(jnp.bfloat16)
    b1_2d = jnp.asarray(b1, jnp.float32).reshape(1, HID_DIM)
    # lane-dense fc2: pad (270, 2) -> (270, 128); fold dropout keep-scale into w2 (exact).
    w2_pad = jnp.zeros((HID_DIM, OUT_PAD), jnp.float32).at[:, :OUT_DIM].set(
        jnp.asarray(w2, jnp.float32) * keep_scale)
    b2_pad = jnp.zeros((1, OUT_PAD), jnp.float32).at[:, :OUT_DIM].set(
        jnp.asarray(b2, jnp.float32).reshape(1, OUT_DIM))

    kernel = functools.partial(_net_kernel, threshold=threshold,
                               apply_dropout=apply_dropout)

    out_pad = pl.pallas_call(
        kernel,
        out_shape=jax.ShapeDtypeStruct((Bp, OUT_PAD), jnp.float32),
        grid=(Bp // TB,),
        in_specs=[
            pl.BlockSpec((TB, IN_DIM), lambda i: (i, 0)),        # x tile
            pl.BlockSpec((TB, HID_DIM), lambda i: (i, 0)),       # dropout bits tile
            pl.BlockSpec((IN_DIM, HID_DIM), lambda i: (0, 0)),   # w1 (resident)
            pl.BlockSpec((1, HID_DIM), lambda i: (0, 0)),        # b1 (resident)
            pl.BlockSpec((HID_DIM, OUT_PAD), lambda i: (0, 0)),  # w2 padded (resident)
            pl.BlockSpec((1, OUT_PAD), lambda i: (0, 0)),        # b2 padded (resident)
        ],
        out_specs=pl.BlockSpec((TB, OUT_PAD), lambda i: (i, 0)),
        compiler_params=pltpu.CompilerParams(
            dimension_semantics=("parallel",)),
    )(x_bf, bits, w1_bf, b1_2d, w2_pad, b2_pad)

    return out_pad[:B, :OUT_DIM]


def init_params(key):
    """Deterministic parameter init (PyTorch Linear-like uniform bounds)."""
    k1, k2, k3, k4 = jax.random.split(key, 4)
    bound1 = 1.0 / (IN_DIM ** 0.5)
    bound2 = 1.0 / (HID_DIM ** 0.5)
    # stored as (in, out) so the kernel does x @ W
    w1 = jax.random.uniform(k1, (IN_DIM, HID_DIM), jnp.float32, -bound1, bound1)
    b1 = jax.random.uniform(k2, (1, HID_DIM), jnp.float32, -bound1, bound1)
    w2 = jax.random.uniform(k3, (HID_DIM, OUT_DIM), jnp.float32, -bound2, bound2)
    b2 = jax.random.uniform(k4, (1, OUT_DIM), jnp.float32, -bound2, bound2)
    return w1, b1, w2, b2


if __name__ == "__main__":
    key = jax.random.PRNGKey(0)
    kx, kp, kd = jax.random.split(key, 3)

    B = 8
    p = 0.5  # dropout probability (the module's constructor arg `p`)

    x = jax.random.normal(kx, (B, IN_DIM), jnp.float32)
    w1, b1, w2, b2 = init_params(kp)

    out = net_forward(x, w1, b1, w2, b2, p=p, key=kd)
    out = jax.block_until_ready(out)

    # ---- checks ----
    assert out.shape == (B, OUT_DIM)
    assert bool(jnp.all(jnp.isfinite(out)))
    assert bool(jnp.all((out >= 0.0) & (out <= 1.0)))

    # pure-JAX reference using the same bf16 fc1 operands and the same dropout bits
    xb = x.astype(jnp.bfloat16).astype(jnp.float32)
    w1b = w1.astype(jnp.bfloat16).astype(jnp.float32)
    bits_ref = jax.random.bits(kd, (B, HID_DIM), dtype=jnp.uint32)
    thr = jnp.uint32(int(round(p * (2 ** 32))))
    h_ref = xb @ w1b + b1
    h_ref = jnp.where(bits_ref >= thr, h_ref / (1.0 - p), 0.0)
    h_ref = jnp.maximum(h_ref, 0.0)
    y_ref = h_ref @ w2 + b2
    ref = 1.0 / (1.0 + jnp.exp(-y_ref))
    assert bool(jnp.allclose(out, ref, atol=1e-2, rtol=1e-2))

    print("KERNEL_OK")
</pallas_src>

<mosaic_0001>
module attributes {stable_mosaic.version = 11 : i64} {
  func.func @_net_kernel(%arg0: i32, %arg1: memref<8x19xbf16, #tpu.memory_space<vmem>>, %arg2: memref<8x270xi32, #tpu.memory_space<vmem>>, %arg3: memref<19x270xbf16, #tpu.memory_space<vmem>>, %arg4: memref<1x270xf32, #tpu.memory_space<vmem>>, %arg5: memref<270x128xf32, #tpu.memory_space<vmem>>, %arg6: memref<1x128xf32, #tpu.memory_space<vmem>>, %arg7: memref<8x128xf32, #tpu.memory_space<vmem>>) attributes {dimension_semantics = [#tpu.dimension_semantics<parallel>], iteration_bounds = array<i64: 1>, scalar_prefetch = 0 : i64, scratch_operands = 0 : i64, tpu.core_type = #tpu.core_type<tc>, window_params = [{transform_indices = @transform_0, window_bounds = array<i64: 8, 19>}, {transform_indices = @transform_1, window_bounds = array<i64: 8, 270>}, {pipeline_mode = #tpu.pipeline_mode<synchronous>, transform_indices = @transform_2, window_bounds = array<i64: 19, 270>}, {pipeline_mode = #tpu.pipeline_mode<synchronous>, transform_indices = @transform_3, window_bounds = array<i64: 1, 270>}, {pipeline_mode = #tpu.pipeline_mode<synchronous>, transform_indices = @transform_4, window_bounds = array<i64: 270, 128>}, {pipeline_mode = #tpu.pipeline_mode<synchronous>, transform_indices = @transform_5, window_bounds = array<i64: 1, 128>}, {transform_indices = @transform_6, window_bounds = array<i64: 8, 128>}]} {
    %c0 = arith.constant 0 : index
    %c0_0 = arith.constant 0 : index
    %0 = vector.load %arg1[%c0, %c0_0] : memref<8x19xbf16, #tpu.memory_space<vmem>>, vector<8x19xbf16>
    %c0_1 = arith.constant 0 : index
    %c0_2 = arith.constant 0 : index
    %1 = vector.load %arg3[%c0_1, %c0_2] : memref<19x270xbf16, #tpu.memory_space<vmem>>, vector<19x270xbf16>
    %cst = arith.constant dense<0.000000e+00> : vector<8x270xf32>
    %2 = tpu.matmul %0, %1, %cst {dimension_numbers = #tpu.dot_dimension_numbers<[1], [0], [0], [1], [0, 0, 1, 1], [], []>} : vector<8x19xbf16>, vector<19x270xbf16>, vector<8x270xf32> -> vector<8x270xf32>
    %c0_3 = arith.constant 0 : index
    %c0_4 = arith.constant 0 : index
    %3 = vector.load %arg4[%c0_3, %c0_4] : memref<1x270xf32, #tpu.memory_space<vmem>>, vector<1x270xf32>
    %4 = vector.broadcast %3 : vector<1x270xf32> to vector<8x270xf32>
    %5 = arith.addf %2, %4 : vector<8x270xf32>
    %c0_5 = arith.constant 0 : index
    %c0_6 = arith.constant 0 : index
    %6 = vector.load %arg2[%c0_5, %c0_6] : memref<8x270xi32, #tpu.memory_space<vmem>>, vector<8x270xi32>
    %c-2147483648_i32 = arith.constant -2147483648 : i32
    %7 = vector.broadcast %c-2147483648_i32 : i32 to vector<8x270xi32>
    %8 = arith.cmpi uge, %6, %7 : vector<8x270xi32>
    %cst_7 = arith.constant 0.000000e+00 : f32
    %9 = vector.broadcast %cst_7 : f32 to vector<8x270xf32>
    %10 = arith.select %8, %5, %9 : vector<8x270xi1>, vector<8x270xf32>
    %cst_8 = arith.constant 0.000000e+00 : f32
    %11 = vector.broadcast %cst_8 : f32 to vector<8x270xf32>
    %12 = arith.maximumf %10, %11 : vector<8x270xf32>
    %c0_9 = arith.constant 0 : index
    %c0_10 = arith.constant 0 : index
    %13 = vector.load %arg5[%c0_9, %c0_10] : memref<270x128xf32, #tpu.memory_space<vmem>>, vector<270x128xf32>
    %cst_11 = arith.constant dense<0.000000e+00> : vector<8x128xf32>
    %14 = tpu.matmul %12, %13, %cst_11 {dimension_numbers = #tpu.dot_dimension_numbers<[1], [0], [0], [1], [0, 0, 1, 1], [], []>} : vector<8x270xf32>, vector<270x128xf32>, vector<8x128xf32> -> vector<8x128xf32>
    %c0_12 = arith.constant 0 : index
    %c0_13 = arith.constant 0 : index
    %15 = vector.load %arg6[%c0_12, %c0_13] : memref<1x128xf32, #tpu.memory_space<vmem>>, vector<1x128xf32>
    %16 = vector.broadcast %15 : vector<1x128xf32> to vector<8x128xf32>
    %17 = arith.addf %14, %16 : vector<8x128xf32>
    %cst_14 = arith.constant 0.000000e+00 : f32
    %18 = vector.broadcast %cst_14 : f32 to vector<8x128xf32>
    %19 = arith.subf %18, %17 : vector<8x128xf32>
    %20 = math.exp %19 : vector<8x128xf32>
    %cst_15 = arith.constant 1.000000e+00 : f32
    %21 = vector.broadcast %cst_15 : f32 to vector<8x128xf32>
    %22 = arith.addf %21, %20 : vector<8x128xf32>
    %cst_16 = arith.constant 1.000000e+00 : f32
    %23 = vector.broadcast %cst_16 : f32 to vector<8x128xf32>
    %24 = arith.divf %23, %22 : vector<8x128xf32>
    %c0_17 = arith.constant 0 : index
    %c0_18 = arith.constant 0 : index
    %25 = vector.load %arg7[%c0_17, %c0_18] : memref<8x128xf32, #tpu.memory_space<vmem>>, vector<8x128xf32>
    tpu.vector_store %arg7[%c0_17, %c0_18], %24 {strides = array<i32>} : memref<8x128xf32, #tpu.memory_space<vmem>>, vector<8x128xf32>,
    return
  }
  func.func @transform_0(%arg0: i32) -> (i32, i32) {
    %c0_i32 = arith.constant 0 : i32
    %c0_i32_0 = arith.constant 0 : i32
    return %arg0, %c0_i32 : i32, i32
  }
  func.func @transform_1(%arg0: i32) -> (i32, i32) {
    %c0_i32 = arith.constant 0 : i32
    %c0_i32_0 = arith.constant 0 : i32
    return %arg0, %c0_i32 : i32, i32
  }
  func.func @transform_2(%arg0: i32) -> (i32, i32) {
    %c0_i32 = arith.constant 0 : i32
    %c0_i32_0 = arith.constant 0 : i32
    %c0_i32_1 = arith.constant 0 : i32
    return %c0_i32, %c0_i32_0 : i32, i32
  }
  func.func @transform_3(%arg0: i32) -> (i32, i32) {
    %c0_i32 = arith.constant 0 : i32
    %c0_i32_0 = arith.constant 0 : i32
    %c0_i32_1 = arith.constant 0 : i32
    return %c0_i32, %c0_i32_0 : i32, i32
  }
  func.func @transform_4(%arg0: i32) -> (i32, i32) {
    %c0_i32 = arith.constant 0 : i32
    %c0_i32_0 = arith.constant 0 : i32
    %c0_i32_1 = arith.constant 0 : i32
    return %c0_i32, %c0_i32_0 : i32, i32
  }
  func.func @transform_5(%arg0: i32) -> (i32, i32) {
    %c0_i32 = arith.constant 0 : i32
    %c0_i32_0 = arith.constant 0 : i32
    %c0_i32_1 = arith.constant 0 : i32
    return %c0_i32, %c0_i32_0 : i32, i32
  }
  func.func @transform_6(%arg0: i32) -> (i32, i32) {
    %c0_i32 = arith.constant 0 : i32
    %c0_i32_0 = arith.constant 0 : i32
    return %arg0, %c0_i32 : i32, i32
  }
}

</mosaic_0001>

<llo_original>
// kernel: tpu_custom_call.1
$region0: #{tpu_custom_call.1}
  #allocation0 [shape = 'u32[]', space=smem, size = 0x4, offset = 0x4, fixed_abs, tag = 'smem constant byte address 0x4 - core index']
  #allocation1 [shape = 'u32[144,128]{1,0:T(1,128)}', space=vmem, size = 0x12000, scoped, tag = 'internal scratch']
  %s0 = inlined_call_operand.hbm [shape: bf16[8,19], index: 0, kind: input, shape index: {}]
  %s1 = inlined_call_operand.hbm [shape: u32[8,270], index: 1, kind: input, shape index: {}]
  %s2 = inlined_call_operand.hbm [shape: bf16[19,270], index: 2, kind: input, shape index: {}]
  %s3 = inlined_call_operand.vmem [shape: f32[1,270], index: 3, kind: input, shape index: {}]
  %s4 = inlined_call_operand.hbm [shape: f32[270,128], index: 4, kind: input, shape index: {}]
  %s5 = inlined_call_operand.vmem [shape: f32[1,128], index: 5, kind: input, shape index: {}]
  %s6 = inlined_call_operand.hbm [shape: f32[8,128], index: 6, kind: output, shape index: {}]
  %s7 = sld [smem:[#allocation0]]
  $region50: #{tpu_custom_call.1} parent=0
    _
  %s9 = ssub.s32 1, %s7
  %s10 = scalar_select 0, %s9, %s7
  $region1: #{tpu_custom_call.1} parent=0
    #allocation2 [shape = 'u8[2048]{0}', space=vmem, size = 0x800, scoped, tag = 'input window, operand 0, single buffered']
    #allocation3 [shape = 's32[1]{0}', space=sflag, size = 0x4, scoped, tag = 'scoped memory for tpu_custom_call.1']
    #allocation4 [shape = 's32[1]{0}', space=sflag, size = 0x4, scoped, tag = 'scoped memory for tpu_custom_call.1']
    #allocation5 [shape = 'u8[12288]{0}', space=vmem, size = 0x3000, scoped, tag = 'input window, operand 1, single buffered']
    #allocation6 [shape = 's32[1]{0}', space=sflag, size = 0x4, scoped, tag = 'scoped memory for tpu_custom_call.1']
    #allocation7 [shape = 'u8[18432]{0}', space=vmem, size = 0x4800, scoped, tag = 'input window, operand 2, single buffered']
    #allocation8 [shape = 'u8[139264]{0}', space=vmem, size = 0x22000, scoped, tag = 'input window, operand 4, single buffered']
    #allocation9 [shape = 's32[1]{0}', space=sflag, size = 0x4, scoped, tag = 'scoped memory for tpu_custom_call.1']
    #allocation10 [shape = 'u8[4096]{0}', space=vmem, size = 0x1000, scoped, tag = 'output window, operand 0, single buffered']
    %11 = vsyncpa [#allocation3], 0
    %12 = vsyncpa [#allocation6], 0
    %13 = vsyncpa [#allocation9], 0
    %14 = vsyncpa [#allocation4], 0
    // Predicated region
    $region2: #{tpu_custom_call.1} parent=1 // pred_check
      _
    $region3: #{tpu_custom_call.1} parent=1 // pred_check_branch
      %16 = sbr.rel (0) target = $region5
    $region4: #{tpu_custom_call.1} parent=1 // pred_region
      %s18 = ssub.s32 64, 64
      %19 = vsyncadd [#allocation3], %s18
      %s21 = sshll.u32 [#allocation2], 4
      %s22 = int_to_ptr.vmem [resolvable:$true] %s21
      %24 = dma.hbm_to_vmem [thread:$0]  %s0, 64, %s22, [#allocation3]
    $region5: #{tpu_custom_call.1} parent=1 // pred_fallthru
      _
    // Predicated region
    $region6: #{tpu_custom_call.1} parent=1 // pred_check
      _
    $region7: #{tpu_custom_call.1} parent=1 // pred_check_branch
      %26 = sbr.rel (0) target = $region9
    $region8: #{tpu_custom_call.1} parent=1 // pred_region
      %s28 = ssub.s32 384, 384
      %29 = vsyncadd [#allocation6], %s28
      %s31 = sshll.u32 [#allocation5], 4
      %s32 = int_to_ptr.vmem [resolvable:$true] %s31
      %34 = dma.hbm_to_vmem [thread:$0]  %s1, 384, %s32, [#allocation6]
    $region9: #{tpu_custom_call.1} parent=1 // pred_fallthru
      _
    // Predicated region
    $region10: #{tpu_custom_call.1} parent=1 // pred_check
      _
    $region11: #{tpu_custom_call.1} parent=1 // pred_check_branch
      %36 = sbr.rel (0) target = $region13
    $region12: #{tpu_custom_call.1} parent=1 // pred_region
      %s38 = ssub.s32 576, 576
      %39 = vsyncadd [#allocation6], %s38
      %s40 = sshll.u32 [#allocation7], 4
      %s41 = int_to_ptr.vmem [resolvable:$true] %s40
      %46 = dma.hbm_to_vmem [thread:$0]  %s2, 576, %s41, [#allocation6], 192, 192, 12
    $region13: #{tpu_custom_call.1} parent=1 // pred_fallthru
      _
    // Predicated region
    $region14: #{tpu_custom_call.1} parent=1 // pred_check
      _
    $region15: #{tpu_custom_call.1} parent=1 // pred_check_branch
      %48 = sbr.rel (0) target = $region17
    $region16: #{tpu_custom_call.1} parent=1 // pred_region
      _
    $region17: #{tpu_custom_call.1} parent=1 // pred_fallthru
      _
    // Predicated region
    $region18: #{tpu_custom_call.1} parent=1 // pred_check
      _
    $region19: #{tpu_custom_call.1} parent=1 // pred_check_branch
      %50 = sbr.rel (0) target = $region21
    $region20: #{tpu_custom_call.1} parent=1 // pred_region
      %s52 = ssub.s32 4352, 4352
      %53 = vsyncadd [#allocation9], %s52
      %s54 = sshll.u32 [#allocation8], 4
      %s55 = int_to_ptr.vmem [resolvable:$true] %s54
      %60 = dma.hbm_to_vmem [thread:$0]  %s4, 4352, %s55, [#allocation9], 128, 128, 8
    $region21: #{tpu_custom_call.1} parent=1 // pred_fallthru
      _
    // Predicated region
    $region22: #{tpu_custom_call.1} parent=1 // pred_check
      _
    $region23: #{tpu_custom_call.1} parent=1 // pred_check_branch
      %62 = sbr.rel (0) target = $region25
    $region24: #{tpu_custom_call.1} parent=1 // pred_region
      _
    $region25: #{tpu_custom_call.1} parent=1 // pred_fallthru
      _
    // Predicated region
    $region26: #{tpu_custom_call.1} parent=1 // pred_check
      _
    $region27: #{tpu_custom_call.1} parent=1 // pred_check_branch
      %64 = sbr.rel (0) target = $region29
    $region28: #{tpu_custom_call.1} parent=1 // pred_region
      %65 = dma.done [#allocation3], 64
    $region29: #{tpu_custom_call.1} parent=1 // pred_fallthru
      _
    // Predicated region
    $region30: #{tpu_custom_call.1} parent=1 // pred_check
      _
    $region31: #{tpu_custom_call.1} parent=1 // pred_check_branch
      %67 = sbr.rel (0) target = $region33
    $region32: #{tpu_custom_call.1} parent=1 // pred_region
      %68 = dma.done [#allocation6], 384
    $region33: #{tpu_custom_call.1} parent=1 // pred_fallthru
      _
    // Predicated region
    $region34: #{tpu_custom_call.1} parent=1 // pred_check
      _
    $region35: #{tpu_custom_call.1} parent=1 // pred_check_branch
      %70 = sbr.rel (0) target = $region37
    $region36: #{tpu_custom_call.1} parent=1 // pred_region
      %71 = dma.done [#allocation6], 576
    $region37: #{tpu_custom_call.1} parent=1 // pred_fallthru
      _
    // Predicated region
    $region38: #{tpu_custom_call.1} parent=1 // pred_check
      _
    $region39: #{tpu_custom_call.1} parent=1 // pred_check_branch
      %73 = sbr.rel (0) target = $region41
    $region40: #{tpu_custom_call.1} parent=1 // pred_region
      %74 = dma.done [#allocation9], 4352
    $region41: #{tpu_custom_call.1} parent=1 // pred_fallthru
      _
    %v76 = vld [vmem:[#allocation2] sm:$0xf]
    %v77 = vld [vmem:[#allocation7] sm:$0xff]
    %v78 = vld [vmem:[#allocation7 + $0x8] sm:$0xf]
    %v79 = vld [vmem:[#allocation7 + $0xc] sm:$0xff]
    %v80 = vld [vmem:[#allocation7 + $0x14] sm:$0xf]
    %v81 = vld [vmem:[#allocation7 + $0x18] sm:$0x33]
    %v82 = vld [vmem:[#allocation7 + $0x20] sm:$0x3]
    %v83 = vld [vmem:[%s3] sm:$0x7]
    %v85 = vlaneseq
    %v86 = vshrl.u32 %v85, 7
    %v87 = vsub.s32 0, %v86
    %v88 = vrot.slane %v83, %v87
    %v89 = vlaneseq
    %v90 = vshrl.u32 %v89, 7
    %v91 = vsub.s32 1, %v90
    %v92 = vrot.slane %v83, %v91
    %v93 = vlaneseq
    %v94 = vshrl.u32 %v93, 7
    %v95 = vsub.s32 2, %v94
    %v96 = vrot.slane %v83, %v95
    %v106 = vunpack.c.l.b16 %v77
    %v107 = vunpack.c.h.b16 %v77
    %v108 = vunpack.c.l.b16 %v78
    %v109 = vunpack.c.l.b16 %v79
    %v110 = vunpack.c.h.b16 %v79
    %v111 = vunpack.c.l.b16 %v80
    %v112 = vunpack.c.l.b16 %v81
    %v113 = vunpack.c.h.b16 %v81
    %v114 = vunpack.c.l.b16 %v82
    %v115 = vpack.c.b16 %v109, %v106
    %v116 = vpack.c.b16 %v110, %v107
    %v117 = vpack.c.b16 %v111, %v108
    %v118 = vpack.c.b16 %v112, %v112
    %v119 = vpack.c.b16 %v113, %v113
    %v120 = vpack.c.b16 %v114, %v114
    %vm124 = vcmask 154624
    %v126 = vsel %vm124, %v76, 0
    %vm128 = vcmask 1040384
    %vm129 = vcmask 1041408
    %v130 = vsel %vm128, 4294967295, 65535
    %v131 = vsel %vm129, %v130, 0
    %v133 = vand.u32 %v118, %v131
    %v136 = vand.u32 %v119, %v131
    %v139 = vand.u32 %v120, %v131
    %141 = vmatprep.subr.bf16.mxu0 %v116
    %142 = vmatpush1.bf16.msra.mxu0 %v115
    %143 = vmatprep.subr.bf16.mxu0 %v136
    %144 = vmatpush1.bf16.msra.mxu0 %v133
    %145 = vmatprep.subr.bf16.mxu0 0
    %146 = vmatpush1.bf16.msra.mxu0 0
    %147 = vmatprep.subr.bf16.mxu0 0
    %148 = vmatpush1.bf16.msra.mxu0 0
    %149 = vmatprep.subr.bf16.mxu0 0
    %150 = vmatpush1.bf16.msra.mxu0 0
    %151 = vmatprep.subr.bf16.mxu0 0
    %152 = vmatpush1.bf16.msra.mxu0 0
    %153 = vmatprep.subr.bf16.mxu0 0
    %154 = vmatpush1.bf16.msra.mxu0 0
    %155 = vmatprep.subr.bf16.mxu0 0
    %156 = vmatpush1.bf16.msra.mxu0 0
    %157 = vmatprep.subr.bf16.mxu0 0
    %158 = vmatpush1.bf16.msra.mxu0 0
    %159 = vmatprep.subr.bf16.mxu0 0
    %160 = vmatpush1.bf16.msra.mxu0 0
    %161 = vmatprep.subr.bf16.mxu0 0
    %162 = vmatpush1.bf16.msra.mxu0 0
    %163 = vmatprep.subr.bf16.mxu0 0
    %164 = vmatpush1.bf16.msra.mxu0 0
    %165 = vmatprep.subr.bf16.mxu0 0
    %166 = vmatpush1.bf16.msra.mxu0 0
    %167 = vmatprep.subr.bf16.mxu0 0
    %168 = vmatpush1.bf16.msra.mxu0 0
    %169 = vmatprep.subr.bf16.mxu0 0
    %170 = vmatpush1.bf16.msra.mxu0 0
    %171 = vmatprep.subr.bf16.mxu0 0
    %172 = vmatpush1.bf16.msra.mxu0 0
    %173 = vmatprep.mubr.bf16.mxu0 0
    %174 = vmatmul.mubr.bf16.gmra.mrb[0].mxu0 %v126
    %v175 = vpop.f32.mrb[0].mxu0
    %v176 = vadd.f32 %v88, %v175
    %v177 = vpop.f32.mrb[0].mxu0
    %v178 = vadd.f32 %v92, %v177
    %v179 = vpop.f32.mrb[0].mxu0
    %v180 = vpop.f32.mrb[0].mxu0
    %181 = vdwg.mxu0
    %182 = vmatprep.subr.bf16.mxu0 0
    %183 = vmatpush1.bf16.msra.mxu0 %v117
    %184 = vmatprep.subr.bf16.mxu0 0
    %185 = vmatpush1.bf16.msra.mxu0 %v139
    %186 = vmatprep.subr.bf16.mxu0 0
    %187 = vmatpush1.bf16.msra.mxu0 0
    %188 = vmatprep.subr.bf16.mxu0 0
    %189 = vmatpush1.bf16.msra.mxu0 0
    %190 = vmatprep.subr.bf16.mxu0 0
    %191 = vmatpush1.bf16.msra.mxu0 0
    %192 = vmatprep.subr.bf16.mxu0 0
    %193 = vmatpush1.bf16.msra.mxu0 0
    %194 = vmatprep.subr.bf16.mxu0 0
    %195 = vmatpush1.bf16.msra.mxu0 0
    %196 = vmatprep.subr.bf16.mxu0 0
    %197 = vmatpush1.bf16.msra.mxu0 0
    %198 = vmatprep.subr.bf16.mxu0 0
    %199 = vmatpush1.bf16.msra.mxu0 0
    %200 = vmatprep.subr.bf16.mxu0 0
    %201 = vmatpush1.bf16.msra.mxu0 0
    %202 = vmatprep.subr.bf16.mxu0 0
    %203 = vmatpush1.bf16.msra.mxu0 0
    %204 = vmatprep.subr.bf16.mxu0 0
    %205 = vmatpush1.bf16.msra.mxu0 0
    %206 = vmatprep.subr.bf16.mxu0 0
    %207 = vmatpush1.bf16.msra.mxu0 0
    %208 = vmatprep.subr.bf16.mxu0 0
    %209 = vmatpush1.bf16.msra.mxu0 0
    %210 = vmatprep.subr.bf16.mxu0 0
    %211 = vmatpush1.bf16.msra.mxu0 0
    %212 = vmatprep.subr.bf16.mxu0 0
    %213 = vmatpush1.bf16.msra.mxu0 0
    %214 = vmatprep.mubr.bf16.mxu0 0
    %215 = vmatmul.mubr.bf16.gmra.mrb[0].mxu0 %v126
    %v216 = vpop.f32.mrb[0].mxu0
    %v217 = vadd.f32 %v96, %v216
    %v218 = vpop.f32.mrb[0].mxu0
    %v219 = vpop.f32.mrb[0].mxu0
    %v220 = vpop.f32.mrb[0].mxu0
    %221 = vdwg.mxu0
    %v222 = vld [vmem:[#allocation5] sm:$0xff]
    %v223 = vld [vmem:[#allocation5 + $0x8] sm:$0xff]
    %v224 = vld [vmem:[#allocation5 + $0x10] sm:$0xff]
    %vm225 = vcmp.ge.u32.totalorder %v222, 2147483648
    %vm226 = vcmp.ge.u32.totalorder %v223, 2147483648
    %vm227 = vcmp.ge.u32.totalorder %v224, 2147483648
    %v228 = vsel %vm225, %v176, 0.0
    %v229 = vsel %vm226, %v178, 0.0
    %v230 = vsel %vm227, %v217, 0.0
    %v231 = vmax.f32 %v228, 0.0
    %v232 = vmax.f32 %v229, 0.0
    %v233 = vmax.f32 %v230, 0.0
    %v234 = vld [vmem:[#allocation8] sm:$0xff]
    %v235 = vld [vmem:[#allocation8 + $0x8] sm:$0xff]
    %v236 = vld [vmem:[#allocation8 + $0x10] sm:$0xff]
    %v237 = vld [vmem:[#allocation8 + $0x18] sm:$0xff]
    %v238 = vld [vmem:[#allocation8 + $0x20] sm:$0xff]
    %v239 = vld [vmem:[#allocation8 + $0x28] sm:$0xff]
    %v240 = vld [vmem:[#allocation8 + $0x30] sm:$0xff]
    %v241 = vld [vmem:[#allocation8 + $0x38] sm:$0xff]
    %v242 = vld [vmem:[#allocation8 + $0x40] sm:$0xff]
    %v243 = vld [vmem:[#allocation8 + $0x48] sm:$0xff]
    %v244 = vld [vmem:[#allocation8 + $0x50] sm:$0xff]
    %v245 = vld [vmem:[#allocation8 + $0x58] sm:$0xff]
    %v246 = vld [vmem:[#allocation8 + $0x60] sm:$0xff]
    %v247 = vld [vmem:[#allocation8 + $0x68] sm:$0xff]
    %v248 = vld [vmem:[#allocation8 + $0x70] sm:$0xff]
    %v249 = vld [vmem:[#allocation8 + $0x78] sm:$0xff]
    %v250 = vld [vmem:[#allocation8 + $0x80] sm:$0xff]
    %v251 = vld [vmem:[#allocation8 + $0x88] sm:$0xff]
    %v252 = vld [vmem:[#allocation8 + $0x90] sm:$0xff]
    %v253 = vld [vmem:[#allocation8 + $0x98] sm:$0xff]
    %v254 = vld [vmem:[#allocation8 + $0xa0] sm:$0xff]
    %v255 = vld [vmem:[#allocation8 + $0xa8] sm:$0xff]
    %v256 = vld [vmem:[#allocation8 + $0xb0] sm:$0xff]
    %v257 = vld [vmem:[#allocation8 + $0xb8] sm:$0xff]
    %v258 = vld [vmem:[#allocation8 + $0xc0] sm:$0xff]
    %v259 = vld [vmem:[#allocation8 + $0xc8] sm:$0xff]
    %v260 = vld [vmem:[#allocation8 + $0xd0] sm:$0xff]
    %v261 = vld [vmem:[#allocation8 + $0xd8] sm:$0xff]
    %v262 = vld [vmem:[#allocation8 + $0xe0] sm:$0xff]
    %v263 = vld [vmem:[#allocation8 + $0xe8] sm:$0xff]
    %v264 = vld [vmem:[#allocation8 + $0xf0] sm:$0xff]
    %v265 = vld [vmem:[#allocation8 + $0xf8] sm:$0xff]
    %v266 = vld [vmem:[#allocation8 + $0x100] sm:$0xff]
    %v267 = vld [vmem:[#allocation8 + $0x108] sm:$0x3f]
    %v268 = vld [vmem:[%s5] sm:$0x1]
    %v270 = vlaneseq
    %v271 = vshrl.u32 %v270, 7
    %v272 = vsub.s32 0, %v271
    %v273 = vrot.slane %v268, %v272
    %vm275 = vcmask 113664
    %v277 = vsel %vm275, %v233, 0
    %vm279 = vcmask 1045504
    %v281 = vsel %vm279, %v267, 0
    %283 = vmatprep.subr.mxu0 0.0
    %284 = vmatpush1.msra.mxu0 %v234
    %285 = vmatprep.subr.mxu0 0.0
    %286 = vmatpush1.msra.mxu0 %v235
    %287 = vmatprep.subr.mxu0 0.0
    %288 = vmatpush1.msra.mxu0 %v236
    %289 = vmatprep.subr.mxu0 0.0
    %290 = vmatpush1.msra.mxu0 %v237
    %291 = vmatprep.subr.mxu0 0.0
    %292 = vmatpush1.msra.mxu0 %v238
    %293 = vmatprep.subr.mxu0 0.0
    %294 = vmatpush1.msra.mxu0 %v239
    %295 = vmatprep.subr.mxu0 0.0
    %296 = vmatpush1.msra.mxu0 %v240
    %297 = vmatprep.subr.mxu0 0.0
    %298 = vmatpush1.msra.mxu0 %v241
    %299 = vmatprep.subr.mxu0 0.0
    %300 = vmatpush1.msra.mxu0 %v242
    %301 = vmatprep.subr.mxu0 0.0
    %302 = vmatpush1.msra.mxu0 %v243
    %303 = vmatprep.subr.mxu0 0.0
    %304 = vmatpush1.msra.mxu0 %v244
    %305 = vmatprep.subr.mxu0 0.0
    %306 = vmatpush1.msra.mxu0 %v245
    %307 = vmatprep.subr.mxu0 0.0
    %308 = vmatpush1.msra.mxu0 %v246
    %309 = vmatprep.subr.mxu0 0.0
    %310 = vmatpush1.msra.mxu0 %v247
    %311 = vmatprep.subr.mxu0 0.0
    %312 = vmatpush1.msra.mxu0 %v248
    %313 = vmatprep.subr.mxu0 0.0
    %314 = vmatpush1.msra.mxu0 %v249
    %315 = vmatprep.subr.mxu0 0.0
    %316 = vmatpush1.msra.mxu0 %v250
    %317 = vmatprep.subr.mxu0 0.0
    %318 = vmatpush1.msra.mxu0 %v251
    %319 = vmatprep.subr.mxu0 0.0
    %320 = vmatpush1.msra.mxu0 %v252
    %321 = vmatprep.subr.mxu0 0.0
    %322 = vmatpush1.msra.mxu0 %v253
    %323 = vmatprep.subr.mxu0 0.0
    %324 = vmatpush1.msra.mxu0 %v254
    %325 = vmatprep.subr.mxu0 0.0
    %326 = vmatpush1.msra.mxu0 %v255
    %327 = vmatprep.subr.mxu0 0.0
    %328 = vmatpush1.msra.mxu0 %v256
    %329 = vmatprep.subr.mxu0 0.0
    %330 = vmatpush1.msra.mxu0 %v257
    %331 = vmatprep.subr.mxu0 0.0
    %332 = vmatpush1.msra.mxu0 %v258
    %333 = vmatprep.subr.mxu0 0.0
    %334 = vmatpush1.msra.mxu0 %v259
    %335 = vmatprep.subr.mxu0 0.0
    %336 = vmatpush1.msra.mxu0 %v260
    %337 = vmatprep.subr.mxu0 0.0
    %338 = vmatpush1.msra.mxu0 %v261
    %339 = vmatprep.subr.mxu0 0.0
    %340 = vmatpush1.msra.mxu0 %v262
    %341 = vmatprep.subr.mxu0 0.0
    %342 = vmatpush1.msra.mxu0 %v263
    %343 = vmatprep.subr.mxu0 0.0
    %344 = vmatpush1.msra.mxu0 %v264
    %345 = vmatprep.subr.mxu0 0.0
    %346 = vmatpush1.msra.mxu0 %v265
    %347 = vmatprep.mubr.f32.mxu0 %v232
    %348 = vmatmul.mubr.f32.gmra.mrb[0].mxu0 %v231
    %v349 = vpop.f32.mrb[0].mxu0
    %v350 = vadd.f32 %v273, %v349
    %v351 = vpop.f32.mrb[0].mxu0
    %352 = vdwg.mxu0
    %353 = vmatprep.subr.mxu0 0.0
    %354 = vmatpush1.msra.mxu0 %v266
    %355 = vmatprep.subr.mxu0 0.0
    %356 = vmatpush1.msra.mxu0 %v281
    %357 = vmatprep.subr.mxu0 0.0
    %358 = vmatpush1.msra.mxu0 0.0
    %359 = vmatprep.subr.mxu0 0.0
    %360 = vmatpush1.msra.mxu0 0.0
    %361 = vmatprep.subr.mxu0 0.0
    %362 = vmatpush1.msra.mxu0 0.0
    %363 = vmatprep.subr.mxu0 0.0
    %364 = vmatpush1.msra.mxu0 0.0
    %365 = vmatprep.subr.mxu0 0.0
    %366 = vmatpush1.msra.mxu0 0.0
    %367 = vmatprep.subr.mxu0 0.0
    %368 = vmatpush1.msra.mxu0 0.0
    %369 = vmatprep.subr.mxu0 0.0
    %370 = vmatpush1.msra.mxu0 0.0
    %371 = vmatprep.subr.mxu0 0.0
    %372 = vmatpush1.msra.mxu0 0.0
    %373 = vmatprep.subr.mxu0 0.0
    %374 = vmatpush1.msra.mxu0 0.0
    %375 = vmatprep.subr.mxu0 0.0
    %376 = vmatpush1.msra.mxu0 0.0
    %377 = vmatprep.subr.mxu0 0.0
    %378 = vmatpush1.msra.mxu0 0.0
    %379 = vmatprep.subr.mxu0 0.0
    %380 = vmatpush1.msra.mxu0 0.0
    %381 = vmatprep.subr.mxu0 0.0
    %382 = vmatpush1.msra.mxu0 0.0
    %383 = vmatprep.subr.mxu0 0.0
    %384 = vmatpush1.msra.mxu0 0.0
    %385 = vmatprep.subr.mxu0 0.0
    %386 = vmatpush1.msra.mxu0 0.0
    %387 = vmatprep.subr.mxu0 0.0
    %388 = vmatpush1.msra.mxu0 0.0
    %389 = vmatprep.subr.mxu0 0.0
    %390 = vmatpush1.msra.mxu0 0.0
    %391 = vmatprep.subr.mxu0 0.0
    %392 = vmatpush1.msra.mxu0 0.0
    %393 = vmatprep.subr.mxu0 0.0
    %394 = vmatpush1.msra.mxu0 0.0
    %395 = vmatprep.subr.mxu0 0.0
    %396 = vmatpush1.msra.mxu0 0.0
    %397 = vmatprep.subr.mxu0 0.0
    %398 = vmatpush1.msra.mxu0 0.0
    %399 = vmatprep.subr.mxu0 0.0
    %400 = vmatpush1.msra.mxu0 0.0
    %401 = vmatprep.subr.mxu0 0.0
    %402 = vmatpush1.msra.mxu0 0.0
    %403 = vmatprep.subr.mxu0 0.0
    %404 = vmatpush1.msra.mxu0 0.0
    %405 = vmatprep.subr.mxu0 0.0
    %406 = vmatpush1.msra.mxu0 0.0
    %407 = vmatprep.subr.mxu0 0.0
    %408 = vmatpush1.msra.mxu0 0.0
    %409 = vmatprep.subr.mxu0 0.0
    %410 = vmatpush1.msra.mxu0 0.0
    %411 = vmatprep.subr.mxu0 0.0
    %412 = vmatpush1.msra.mxu0 0.0
    %413 = vmatprep.subr.mxu0 0.0
    %414 = vmatpush1.msra.mxu0 0.0
    %415 = vmatprep.subr.mxu0 0.0
    %416 = vmatpush1.msra.mxu0 0.0
    %417 = vmatprep.mubr.f32.mxu0 0.0
    %418 = vmatmul.mubr.f32.gmra.mrb[0].mxu0 %v277
    %v419 = vpop.f32.mrb[0].mxu0
    %v420 = vadd.f32 %v350, %v419
    %v421 = vpop.f32.mrb[0].mxu0
    %422 = vdwg.mxu0
    %v423 = vsub.f32 0.0, %v420
    %v424 = vmul.f32 %v423, 1.442695
    %v425 = vpow.pop %v424
    %v426 = vadd.f32 %v425, 1.0
    %v427 = vrcp.pop %v426
    %v428 = vmul.f32 1.0, %v427
    %429 = vst [vmem:[#allocation10] sm:$0xff] %v428
    // Predicated region
    $region42: #{tpu_custom_call.1} parent=1 // pred_check
      _
    $region43: #{tpu_custom_call.1} parent=1 // pred_check_branch
      %431 = sbr.rel (0) target = $region45
    $region44: #{tpu_custom_call.1} parent=1 // pred_region
      %s433 = ssub.s32 128, 128
      %434 = vsyncadd [#allocation4], %s433
      %s436 = sshll.u32 [#allocation10], 4
      %s437 = int_to_ptr.vmem [resolvable:$true] %s436
      %439 = dma.vmem_to_hbm [thread:$0]  %s437, 128, %s6, [#allocation4]
    $region45: #{tpu_custom_call.1} parent=1 // pred_fallthru
      _
    // Predicated region
    $region46: #{tpu_custom_call.1} parent=1 // pred_check
      _
    $region47: #{tpu_custom_call.1} parent=1 // pred_check_branch
      %441 = sbr.rel (0) target = $region49
    $region48: #{tpu_custom_call.1} parent=1 // pred_region
      %442 = dma.done [#allocation4], 128
    $region49: #{tpu_custom_call.1} parent=1 // pred_fallthru
      _
    %443 = vsyncpa [#allocation3], 1
    %444 = vsyncpa [#allocation6], 1
    %445 = vsyncpa [#allocation9], 1
    %446 = vsyncpa [#allocation4], 1

</llo_original>
